<compile_context>
chip_gen: v5e
topology: v5e:2x2
jax: 0.10.0
libtpu: 0.0.40
codegen_flags: <defaults>
</compile_context>

<pallas_src>
import jax
import jax.numpy as jnp
from jax import lax
from jax.experimental import pallas as pl
from jax.experimental.pallas import tpu as pltpu
from jax.scipy.linalg import block_diag

UNIFORM_SIGMA = 3.46
LANES = 128            # in-kernel activation width (one vreg of lanes)
WIDE = 2 * LANES       # merged [conv | skip] block output width


def _vmem_spec():
    # whole (tiny) array resident in VMEM; no grid tiling needed at these sizes
    return pl.BlockSpec(memory_space=pltpu.MemorySpace.VMEM)


# ------------------------------ fused kernel -------------------------------- #

def fused_kernel(x_ref, wblk_ref, wmlp_ref, o_ref):
    x = x_ref[...]                                               # (N, 128): obs|act|0|1
    # ReduceBlocks: one merged [conv | skip] MXU push per block; halves lane-aligned.
    for b in range(wblk_ref.shape[0]):
        y = jnp.dot(x, wblk_ref[b], preferred_element_type=jnp.float32)   # (N, 256)
        x = jnp.maximum(y[:, :LANES], 0.0) + y[:, LANES:]                 # relu(conv)+skip
    # MLP head (biases + action scaling folded into the slab via the 1-lane).
    n_mlp = wmlp_ref.shape[0]
    for i in range(n_mlp - 1):
        x = jnp.maximum(jnp.dot(x, wmlp_ref[i], preferred_element_type=jnp.float32), 0.0)
    y = jnp.dot(x, wmlp_ref[n_mlp - 1], preferred_element_type=jnp.float32)
    o_ref[...] = y[:, :o_ref.shape[1]]


def build_forward(act_pos):
    one_pos = LANES - 1

    @jax.jit
    def forward(obs, act, wblk, wmlp):
        n = obs.shape[0]
        feat = obs.reshape(n, -1).astype(jnp.float32)    # free reshape; C/T perm is in the weights
        act_f = act.astype(jnp.float32)
        parts = [feat]
        gap0 = act_pos - feat.shape[1]
        if gap0 > 0:
            parts.append(jnp.zeros((n, gap0), jnp.float32))
        parts.append(act_f)
        gap1 = one_pos - act_pos - act_f.shape[1]
        if gap1 > 0:
            parts.append(jnp.zeros((n, gap1), jnp.float32))
        parts.append(jnp.ones((n, 1), jnp.float32))      # constant-1 lane (bias carrier)
        x = jnp.concatenate(parts, axis=1)               # (N, 128) layout plumbing only
        return pl.pallas_call(
            fused_kernel,
            out_shape=jax.ShapeDtypeStruct((n, 3), jnp.float32),
            in_specs=[_vmem_spec()] * 3,
            out_specs=_vmem_spec(),
        )(x, wblk, wmlp)

    return forward


# -------------------------- one-time parameter packing ---------------------- #

def pack_params(blocks, fcs, obs_dim, act_dim, a_lo, b_hi):
    """Pack all QFunction parameters into two fused-kernel weight slabs (runs once)."""
    c_obs, t_len = obs_dim
    act_scale = UNIFORM_SIGMA / (b_hi - a_lo)
    act_shift = -UNIFORM_SIGMA * a_lo / (b_hi - a_lo) - 0.5 * UNIFORM_SIGMA

    # scale_input: identity on the one-hot channels, affine on the last channel
    ch_scale = jnp.ones((c_obs,), jnp.float32).at[-1].set(act_scale)
    ch_shift = jnp.zeros((c_obs,), jnp.float32).at[-1].set(act_shift)

    one_pos = LANES - 1

    # feature widths at every block boundary -> pick lanes for act / constant-1
    h_sizes = [t_len * c_obs]
    tt, cc = t_len, c_obs
    for (wconv, _bconv, _w, _b) in blocks:
        cc = wconv.shape[0]
        assert tt % 2 == 0, "odd time length not supported by the packed kernel"
        tt //= 2
        h_sizes.append(tt * cc)
    act_pos = max(h_sizes)
    assert act_pos + act_dim <= one_pos
    assert max(w.shape[1] for (w, _b) in fcs) <= one_pos

    # ----- ReduceBlock slab: (n_blocks, 128, 256), columns = [conv_128 | skip_128]
    wblk = []
    t_in, c_in = t_len, c_obs
    for bi, (wconv, bconv, w1x1, b1x1) in enumerate(blocks):
        c_out = wconv.shape[0]
        # TODO(synk): odd-T replicate-padding / AvgPool(count_include_pad=False)
        # branch not implemented (dead code for the 16->8->4->2->1 halving here).
        assert t_in % 2 == 0
        t_out = t_in // 2
        h_in, h_out = t_in * c_in, t_out * c_out

        # stride-2/kernel-2 conv as a (2*Cin, Cout) matmul: rows = [k=0 ch | k=1 ch]
        wc = jnp.transpose(wconv, (2, 1, 0)).reshape(2 * c_in, c_out)
        if w1x1 is None:                                  # skip path = Identity
            w1m = jnp.eye(c_in, dtype=jnp.float32)
            bsk = jnp.zeros((c_out,), jnp.float32)
        else:
            w1m = w1x1.T                                  # (Cin, Cout)
            bsk = b1x1
        ws = 0.5 * jnp.concatenate([w1m, w1m], axis=0)    # avg-pool folded in

        wconv_big = block_diag(*([wc] * t_out))           # (Tin*Cin, Tout*Cout)
        wskip_big = block_diag(*([ws] * t_out))
        bconv_big = jnp.tile(bconv, t_out)
        bskip_big = jnp.tile(bsk, t_out)

        if bi == 0:
            # fold scale_input into weight/bias (exact, linear in x)
            s_col = jnp.tile(ch_scale, t_in)              # t-major col = t*Cin + ci
            sh_col = jnp.tile(ch_shift, t_in)
            bconv_big = bconv_big + sh_col @ wconv_big
            bskip_big = bskip_big + sh_col @ wskip_big
            wconv_big = s_col[:, None] * wconv_big
            wskip_big = s_col[:, None] * wskip_big
            # bake the (N,C,T)->(N,T,C) permutation into the weight rows so the
            # kernel input can be a free reshape of obs: input col = ci*T + t
            r = jnp.arange(h_in)
            perm = (r % t_in) * c_in + (r // t_in)
            wconv_big = wconv_big[perm]
            wskip_big = wskip_big[perm]

        w = jnp.zeros((LANES, WIDE), jnp.float32)
        w = w.at[:h_in, :h_out].set(wconv_big)
        w = w.at[:h_in, LANES:LANES + h_out].set(wskip_big)
        w = w.at[one_pos, :h_out].set(bconv_big)                  # biases via 1-lane
        w = w.at[one_pos, LANES:LANES + h_out].set(bskip_big)
        # pass-throughs on the (non-ReLU'd) skip half: action lanes and the 1-lane
        for a in range(act_dim):
            w = w.at[act_pos + a, LANES + act_pos + a].set(1.0)
        w = w.at[one_pos, LANES + one_pos].set(1.0)
        wblk.append(w)

        t_in, c_in = t_out, c_out

    assert t_in == 1, "halving plan must reduce the time axis to length 1"
    c_last = c_in

    # ----- MLP slab: (n_fc, 128, 128); action scaling + biases folded in
    wmlp = []
    for li, (w, b) in enumerate(fcs):
        m = jnp.zeros((LANES, LANES), jnp.float32)
        if li == 0:
            m = m.at[:c_last, :w.shape[1]].set(w[:c_last])
            m = m.at[act_pos:act_pos + act_dim, :w.shape[1]].set(act_scale * w[c_last:])
            m = m.at[one_pos, :w.shape[1]].set(b + act_shift * jnp.sum(w[c_last:], axis=0))
        else:
            m = m.at[:w.shape[0], :w.shape[1]].set(w)
            m = m.at[one_pos, :w.shape[1]].set(b)
        if li < len(fcs) - 1:
            m = m.at[one_pos, one_pos].set(1.0)   # carry the 1-lane through ReLU layers
        wmlp.append(m)

    return (jnp.stack(wblk).astype(jnp.float32),
            jnp.stack(wmlp).astype(jnp.float32),
            act_pos)


# --------------------------- parameters (synthetic) ------------------------- #

def init_params(key, obs_dim, act_dim, channel_sizes, fc_sizes):
    """Deterministic synthetic parameters with PyTorch-default-style shapes."""
    c_obs, _ = obs_dim
    all_c = [c_obs] + list(channel_sizes)
    blocks = []
    for i in range(len(channel_sizes)):
        c_in, c_out = all_c[i], all_c[i + 1]
        key, k1, k2, k3, k4 = jax.random.split(key, 5)
        bound = 1.0 / jnp.sqrt(float(c_in * 2))
        wconv = jax.random.uniform(k1, (c_out, c_in, 2), jnp.float32, -bound, bound)
        bconv = jax.random.uniform(k2, (c_out,), jnp.float32, -bound, bound)
        if c_in == c_out:
            w1x1, b1x1 = None, None                      # skip path = Identity
        else:
            b1 = 1.0 / jnp.sqrt(float(c_in))
            w1x1 = jax.random.uniform(k3, (c_out, c_in), jnp.float32, -b1, b1)
            b1x1 = jax.random.uniform(k4, (c_out,), jnp.float32, -b1, b1)
        blocks.append((wconv, bconv, w1x1, b1x1))

    fcs = []
    sizes = [channel_sizes[-1] + act_dim] + list(fc_sizes) + [3]
    for i in range(len(sizes) - 1):
        key, k1, k2 = jax.random.split(key, 3)
        bound = 1.0 / jnp.sqrt(float(sizes[i]))
        w = jax.random.uniform(k1, (sizes[i], sizes[i + 1]), jnp.float32, -bound, bound)
        b = jax.random.uniform(k2, (sizes[i + 1],), jnp.float32, -bound, bound)
        fcs.append((w, b))
    return blocks, fcs


# --------------------------- pure-JAX reference ----------------------------- #

def reference_forward(obs, act, blocks, fcs, a_lo, b_hi):
    sigma = jnp.ones_like(obs).at[:, -1:, :].set(UNIFORM_SIGMA)
    am = jnp.full_like(obs, -0.5).at[:, -1:, :].set(a_lo)
    bm = jnp.full_like(obs, 0.5).at[:, -1:, :].set(b_hi)
    x = sigma * ((obs - am) / (bm - am) - 0.5)
    for (wconv, bconv, w1x1, b1x1) in blocks:
        conv = lax.conv_general_dilated(
            x, wconv, window_strides=(2,), padding='VALID',
            dimension_numbers=('NCH', 'OIH', 'NCH')) + bconv[None, :, None]
        conv = jnp.maximum(conv, 0.0)
        pool = 0.5 * (x[:, :, 0::2] + x[:, :, 1::2])
        skip = pool if w1x1 is None else (
            jnp.einsum('nct,oc->not', pool, w1x1) + b1x1[None, :, None])
        x = conv + skip
    obs_flat = x.reshape(x.shape[0], -1)
    act_s = UNIFORM_SIGMA * ((act - a_lo) / (b_hi - a_lo) - 0.5)
    z = jnp.concatenate([obs_flat, act_s], axis=-1)
    (w0, b0), (w1, b1), (w2, b2) = fcs
    h = jnp.maximum(z @ w0 + b0, 0.0)
    h = jnp.maximum(h @ w1 + b1, 0.0)
    return h @ w2 + b2


# ----------------------------------- main ----------------------------------- #

if __name__ == "__main__":
    # QFunction(obs_dim=(4,16), act_dim=2, channel_sizes=(8,8,16,16),
    #           fc_sizes=(32,32), act_lower_limit=-1, act_upper_limit=1,
    #           perform_norm=False)
    obs_dim = (4, 16)                # (channels, time)
    act_dim = 2
    channel_sizes = (8, 8, 16, 16)   # time: 16 -> 8 -> 4 -> 2 -> 1
    fc_sizes = (32, 32)
    a_lo, b_hi = -1.0, 1.0
    batch = 2

    key = jax.random.PRNGKey(0)
    key, ko, ka, kp = jax.random.split(key, 4)
    obs = jax.random.uniform(ko, (batch,) + obs_dim, jnp.float32, a_lo, b_hi)
    act = jax.random.uniform(ka, (batch, act_dim), jnp.float32, a_lo, b_hi)
    blocks, fcs = init_params(kp, obs_dim, act_dim, channel_sizes, fc_sizes)

    # one-time packing into two VMEM slabs (outside the jitted forward)
    wblk, wmlp, act_pos = pack_params(blocks, fcs, obs_dim, act_dim, a_lo, b_hi)
    forward = build_forward(act_pos)

    q = forward(obs, act, wblk, wmlp)
    q = jax.block_until_ready(q)

    q_ref = reference_forward(obs, act, blocks, fcs, a_lo, b_hi)
    assert q.shape == (batch, 3)
    assert jnp.allclose(q, q_ref, atol=1e-4, rtol=1e-4), (q, q_ref)
    # TODO(synk): BatchNorm branch (perform_norm=True) not implemented; QFunction default is Identity.
    print("KERNEL_OK")
</pallas_src>

<mosaic_0001>
module attributes {stable_mosaic.version = 11 : i64} {
  func.func @fused_kernel(%arg0: memref<2x128xf32, #tpu.memory_space<vmem>>, %arg1: memref<4x128x256xf32, #tpu.memory_space<vmem>>, %arg2: memref<3x128x128xf32, #tpu.memory_space<vmem>>, %arg3: memref<2x3xf32, #tpu.memory_space<vmem>>) attributes {dimension_semantics = [], scalar_prefetch = 0 : i64, scratch_operands = 0 : i64, tpu.core_type = #tpu.core_type<tc>} {
    %c0 = arith.constant 0 : index
    %c0_0 = arith.constant 0 : index
    %0 = vector.load %arg0[%c0, %c0_0] : memref<2x128xf32, #tpu.memory_space<vmem>>, vector<2x128xf32>
    %c0_1 = arith.constant 0 : index
    %c0_2 = arith.constant 0 : index
    %c0_3 = arith.constant 0 : index
    %1 = vector.load %arg1[%c0_1, %c0_2, %c0_3] : memref<4x128x256xf32, #tpu.memory_space<vmem>>, vector<1x128x256xf32>
    %2 = vector.shape_cast %1 : vector<1x128x256xf32> to vector<128x256xf32>
    %cst = arith.constant dense<0.000000e+00> : vector<2x256xf32>
    %3 = tpu.matmul %0, %2, %cst {dimension_numbers = #tpu.dot_dimension_numbers<[1], [0], [0], [1], [0, 0, 1, 1], [], []>} : vector<2x128xf32>, vector<128x256xf32>, vector<2x256xf32> -> vector<2x256xf32>
    %4 = vector.extract_strided_slice %3 {offsets = [0, 0], sizes = [2, 128], strides = [1, 1]} : vector<2x256xf32> to vector<2x128xf32>
    %cst_4 = arith.constant 0.000000e+00 : f32
    %5 = vector.broadcast %cst_4 : f32 to vector<2x128xf32>
    %6 = arith.maximumf %4, %5 : vector<2x128xf32>
    %7 = vector.extract_strided_slice %3 {offsets = [0, 128], sizes = [2, 128], strides = [1, 1]} : vector<2x256xf32> to vector<2x128xf32>
    %8 = arith.addf %6, %7 : vector<2x128xf32>
    %c1 = arith.constant 1 : index
    %c0_5 = arith.constant 0 : index
    %c0_6 = arith.constant 0 : index
    %9 = vector.load %arg1[%c1, %c0_5, %c0_6] : memref<4x128x256xf32, #tpu.memory_space<vmem>>, vector<1x128x256xf32>
    %10 = vector.shape_cast %9 : vector<1x128x256xf32> to vector<128x256xf32>
    %cst_7 = arith.constant dense<0.000000e+00> : vector<2x256xf32>
    %11 = tpu.matmul %8, %10, %cst_7 {dimension_numbers = #tpu.dot_dimension_numbers<[1], [0], [0], [1], [0, 0, 1, 1], [], []>} : vector<2x128xf32>, vector<128x256xf32>, vector<2x256xf32> -> vector<2x256xf32>
    %12 = vector.extract_strided_slice %11 {offsets = [0, 0], sizes = [2, 128], strides = [1, 1]} : vector<2x256xf32> to vector<2x128xf32>
    %cst_8 = arith.constant 0.000000e+00 : f32
    %13 = vector.broadcast %cst_8 : f32 to vector<2x128xf32>
    %14 = arith.maximumf %12, %13 : vector<2x128xf32>
    %15 = vector.extract_strided_slice %11 {offsets = [0, 128], sizes = [2, 128], strides = [1, 1]} : vector<2x256xf32> to vector<2x128xf32>
    %16 = arith.addf %14, %15 : vector<2x128xf32>
    %c2 = arith.constant 2 : index
    %c0_9 = arith.constant 0 : index
    %c0_10 = arith.constant 0 : index
    %17 = vector.load %arg1[%c2, %c0_9, %c0_10] : memref<4x128x256xf32, #tpu.memory_space<vmem>>, vector<1x128x256xf32>
    %18 = vector.shape_cast %17 : vector<1x128x256xf32> to vector<128x256xf32>
    %cst_11 = arith.constant dense<0.000000e+00> : vector<2x256xf32>
    %19 = tpu.matmul %16, %18, %cst_11 {dimension_numbers = #tpu.dot_dimension_numbers<[1], [0], [0], [1], [0, 0, 1, 1], [], []>} : vector<2x128xf32>, vector<128x256xf32>, vector<2x256xf32> -> vector<2x256xf32>
    %20 = vector.extract_strided_slice %19 {offsets = [0, 0], sizes = [2, 128], strides = [1, 1]} : vector<2x256xf32> to vector<2x128xf32>
    %cst_12 = arith.constant 0.000000e+00 : f32
    %21 = vector.broadcast %cst_12 : f32 to vector<2x128xf32>
    %22 = arith.maximumf %20, %21 : vector<2x128xf32>
    %23 = vector.extract_strided_slice %19 {offsets = [0, 128], sizes = [2, 128], strides = [1, 1]} : vector<2x256xf32> to vector<2x128xf32>
    %24 = arith.addf %22, %23 : vector<2x128xf32>
    %c3 = arith.constant 3 : index
    %c0_13 = arith.constant 0 : index
    %c0_14 = arith.constant 0 : index
    %25 = vector.load %arg1[%c3, %c0_13, %c0_14] : memref<4x128x256xf32, #tpu.memory_space<vmem>>, vector<1x128x256xf32>
    %26 = vector.shape_cast %25 : vector<1x128x256xf32> to vector<128x256xf32>
    %cst_15 = arith.constant dense<0.000000e+00> : vector<2x256xf32>
    %27 = tpu.matmul %24, %26, %cst_15 {dimension_numbers = #tpu.dot_dimension_numbers<[1], [0], [0], [1], [0, 0, 1, 1], [], []>} : vector<2x128xf32>, vector<128x256xf32>, vector<2x256xf32> -> vector<2x256xf32>
    %28 = vector.extract_strided_slice %27 {offsets = [0, 0], sizes = [2, 128], strides = [1, 1]} : vector<2x256xf32> to vector<2x128xf32>
    %cst_16 = arith.constant 0.000000e+00 : f32
    %29 = vector.broadcast %cst_16 : f32 to vector<2x128xf32>
    %30 = arith.maximumf %28, %29 : vector<2x128xf32>
    %31 = vector.extract_strided_slice %27 {offsets = [0, 128], sizes = [2, 128], strides = [1, 1]} : vector<2x256xf32> to vector<2x128xf32>
    %32 = arith.addf %30, %31 : vector<2x128xf32>
    %c0_17 = arith.constant 0 : index
    %c0_18 = arith.constant 0 : index
    %c0_19 = arith.constant 0 : index
    %33 = vector.load %arg2[%c0_17, %c0_18, %c0_19] : memref<3x128x128xf32, #tpu.memory_space<vmem>>, vector<1x128x128xf32>
    %34 = vector.shape_cast %33 : vector<1x128x128xf32> to vector<128x128xf32>
    %cst_20 = arith.constant dense<0.000000e+00> : vector<2x128xf32>
    %35 = tpu.matmul %32, %34, %cst_20 {dimension_numbers = #tpu.dot_dimension_numbers<[1], [0], [0], [1], [0, 0, 1, 1], [], []>} : vector<2x128xf32>, vector<128x128xf32>, vector<2x128xf32> -> vector<2x128xf32>
    %cst_21 = arith.constant 0.000000e+00 : f32
    %36 = vector.broadcast %cst_21 : f32 to vector<2x128xf32>
    %37 = arith.maximumf %35, %36 : vector<2x128xf32>
    %c1_22 = arith.constant 1 : index
    %c0_23 = arith.constant 0 : index
    %c0_24 = arith.constant 0 : index
    %38 = vector.load %arg2[%c1_22, %c0_23, %c0_24] : memref<3x128x128xf32, #tpu.memory_space<vmem>>, vector<1x128x128xf32>
    %39 = vector.shape_cast %38 : vector<1x128x128xf32> to vector<128x128xf32>
    %cst_25 = arith.constant dense<0.000000e+00> : vector<2x128xf32>
    %40 = tpu.matmul %37, %39, %cst_25 {dimension_numbers = #tpu.dot_dimension_numbers<[1], [0], [0], [1], [0, 0, 1, 1], [], []>} : vector<2x128xf32>, vector<128x128xf32>, vector<2x128xf32> -> vector<2x128xf32>
    %cst_26 = arith.constant 0.000000e+00 : f32
    %41 = vector.broadcast %cst_26 : f32 to vector<2x128xf32>
    %42 = arith.maximumf %40, %41 : vector<2x128xf32>
    %c2_27 = arith.constant 2 : index
    %c0_28 = arith.constant 0 : index
    %c0_29 = arith.constant 0 : index
    %43 = vector.load %arg2[%c2_27, %c0_28, %c0_29] : memref<3x128x128xf32, #tpu.memory_space<vmem>>, vector<1x128x128xf32>
    %44 = vector.shape_cast %43 : vector<1x128x128xf32> to vector<128x128xf32>
    %cst_30 = arith.constant dense<0.000000e+00> : vector<2x128xf32>
    %45 = tpu.matmul %42, %44, %cst_30 {dimension_numbers = #tpu.dot_dimension_numbers<[1], [0], [0], [1], [0, 0, 1, 1], [], []>} : vector<2x128xf32>, vector<128x128xf32>, vector<2x128xf32> -> vector<2x128xf32>
    %46 = vector.extract_strided_slice %45 {offsets = [0, 0], sizes = [2, 3], strides = [1, 1]} : vector<2x128xf32> to vector<2x3xf32>
    %c0_31 = arith.constant 0 : index
    %c0_32 = arith.constant 0 : index
    %47 = vector.load %arg3[%c0_31, %c0_32] : memref<2x3xf32, #tpu.memory_space<vmem>>, vector<2x3xf32>
    tpu.vector_store %arg3[%c0_31, %c0_32], %46 {strides = array<i32>} : memref<2x3xf32, #tpu.memory_space<vmem>>, vector<2x3xf32>,
    return
  }
}

</mosaic_0001>

<llo_original>
// kernel: forward.1
$region0: #{forward.1}
  #allocation0 [shape = 'u32[]', space=smem, size = 0x4, offset = 0x4, fixed_abs, tag = 'smem constant byte address 0x4 - core index']
  #allocation1 [shape = 'u32[72,128]{1,0:T(1,128)}', space=vmem, size = 0x9000, scoped, tag = 'internal scratch']
  %s0 = inlined_call_operand.vmem [shape: f32[2,128], index: 0, kind: input, shape index: {}]
  %s1 = inlined_call_operand.hbm [shape: f32[4,128,256], index: 1, kind: input, shape index: {}]
  %s2 = inlined_call_operand.hbm [shape: f32[3,128,128], index: 2, kind: input, shape index: {}]
  %s3 = inlined_call_operand.hbm [shape: f32[2,3], index: 3, kind: output, shape index: {}]
  %s4 = sld [smem:[#allocation0]]
  $region30: #{forward.1} parent=0
    _
  %s6 = ssub.s32 1, %s4
  %s7 = scalar_select 0, %s6, %s4
  $region1: #{forward.1} parent=0
    #allocation2 [shape = 'u8[524288]{0}', space=vmem, size = 0x80000, scoped, tag = 'input window, operand 1, single buffered']
    #allocation3 [shape = 's32[1]{0}', space=sflag, size = 0x4, scoped, tag = 'scoped memory for forward.1']
    #allocation4 [shape = 's32[1]{0}', space=sflag, size = 0x4, scoped, tag = 'scoped memory for forward.1']
    #allocation5 [shape = 'u8[196608]{0}', space=vmem, size = 0x30000, scoped, tag = 'input window, operand 2, single buffered']
    #allocation6 [shape = 's32[1]{0}', space=sflag, size = 0x4, scoped, tag = 'scoped memory for forward.1']
    #allocation7 [shape = 'u8[1024]{0}', space=vmem, size = 0x400, scoped, tag = 'output window, operand 0, single buffered']
    %8 = vsyncpa [#allocation3], 0
    %9 = vsyncpa [#allocation6], 0
    %10 = vsyncpa [#allocation4], 0
    // Predicated region
    $region2: #{forward.1} parent=1 // pred_check
      _
    $region3: #{forward.1} parent=1 // pred_check_branch
      %12 = sbr.rel (0) target = $region5
    $region4: #{forward.1} parent=1 // pred_region
      _
    $region5: #{forward.1} parent=1 // pred_fallthru
      _
    // Predicated region
    $region6: #{forward.1} parent=1 // pred_check
      _
    $region7: #{forward.1} parent=1 // pred_check_branch
      %14 = sbr.rel (0) target = $region9
    $region8: #{forward.1} parent=1 // pred_region
      %16 = vsyncadd [#allocation3], 0
      %s17 = sshll.u32 %s1, 4
      %s18 = int_to_ptr.hbm [resolvable:$true] %s17
      %s19 = sshll.u32 [#allocation2], 4
      %s20 = int_to_ptr.vmem [resolvable:$true] %s19
      %25 = dma.hbm_to_vmem [thread:$0]  %s18, 16384, %s20, [#allocation3], 256, 256, 16
    $region9: #{forward.1} parent=1 // pred_fallthru
      _
    // Predicated region
    $region10: #{forward.1} parent=1 // pred_check
      _
    $region11: #{forward.1} parent=1 // pred_check_branch
      %27 = sbr.rel (0) target = $region13
    $region12: #{forward.1} parent=1 // pred_region
      %29 = vsyncadd [#allocation6], 0
      %s30 = sshll.u32 %s2, 4
      %s31 = int_to_ptr.hbm [resolvable:$true] %s30
      %s32 = sshll.u32 [#allocation5], 4
      %s33 = int_to_ptr.vmem [resolvable:$true] %s32
      %38 = dma.hbm_to_vmem [thread:$0]  %s31, 6144, %s33, [#allocation6], 128, 128, 8
    $region13: #{forward.1} parent=1 // pred_fallthru
      _
    // Predicated region
    $region14: #{forward.1} parent=1 // pred_check
      _
    $region15: #{forward.1} parent=1 // pred_check_branch
      %40 = sbr.rel (0) target = $region17
    $region16: #{forward.1} parent=1 // pred_region
      %42 = dma.done [#allocation3], 16384
    $region17: #{forward.1} parent=1 // pred_fallthru
      _
    // Predicated region
    $region18: #{forward.1} parent=1 // pred_check
      _
    $region19: #{forward.1} parent=1 // pred_check_branch
      %44 = sbr.rel (0) target = $region21
    $region20: #{forward.1} parent=1 // pred_region
      %46 = dma.done [#allocation6], 6144
    $region21: #{forward.1} parent=1 // pred_fallthru
      _
    %v47 = vld [vmem:[%s0] sm:$0x3]
    %v48 = vld [vmem:[#allocation2] sm:$0xff]
    %v49 = vld [vmem:[#allocation2 + $0x8] sm:$0xff]
    %v50 = vld [vmem:[#allocation2 + $0x10] sm:$0xff]
    %v51 = vld [vmem:[#allocation2 + $0x18] sm:$0xff]
    %v52 = vld [vmem:[#allocation2 + $0x20] sm:$0xff]
    %v53 = vld [vmem:[#allocation2 + $0x28] sm:$0xff]
    %v54 = vld [vmem:[#allocation2 + $0x30] sm:$0xff]
    %v55 = vld [vmem:[#allocation2 + $0x38] sm:$0xff]
    %v56 = vld [vmem:[#allocation2 + $0x40] sm:$0xff]
    %v57 = vld [vmem:[#allocation2 + $0x48] sm:$0xff]
    %v58 = vld [vmem:[#allocation2 + $0x50] sm:$0xff]
    %v59 = vld [vmem:[#allocation2 + $0x58] sm:$0xff]
    %v60 = vld [vmem:[#allocation2 + $0x60] sm:$0xff]
    %v61 = vld [vmem:[#allocation2 + $0x68] sm:$0xff]
    %v62 = vld [vmem:[#allocation2 + $0x70] sm:$0xff]
    %v63 = vld [vmem:[#allocation2 + $0x78] sm:$0xff]
    %v64 = vld [vmem:[#allocation2 + $0x80] sm:$0xff]
    %v65 = vld [vmem:[#allocation2 + $0x88] sm:$0xff]
    %v66 = vld [vmem:[#allocation2 + $0x90] sm:$0xff]
    %v67 = vld [vmem:[#allocation2 + $0x98] sm:$0xff]
    %v68 = vld [vmem:[#allocation2 + $0xa0] sm:$0xff]
    %v69 = vld [vmem:[#allocation2 + $0xa8] sm:$0xff]
    %v70 = vld [vmem:[#allocation2 + $0xb0] sm:$0xff]
    %v71 = vld [vmem:[#allocation2 + $0xb8] sm:$0xff]
    %v72 = vld [vmem:[#allocation2 + $0xc0] sm:$0xff]
    %v73 = vld [vmem:[#allocation2 + $0xc8] sm:$0xff]
    %v74 = vld [vmem:[#allocation2 + $0xd0] sm:$0xff]
    %v75 = vld [vmem:[#allocation2 + $0xd8] sm:$0xff]
    %v76 = vld [vmem:[#allocation2 + $0xe0] sm:$0xff]
    %v77 = vld [vmem:[#allocation2 + $0xe8] sm:$0xff]
    %v78 = vld [vmem:[#allocation2 + $0xf0] sm:$0xff]
    %v79 = vld [vmem:[#allocation2 + $0xf8] sm:$0xff]
    %80 = vmatpush.msra.mxu0 %v78
    %81 = vmatpush.msra.mxu0 %v76
    %82 = vmatpush.msra.mxu0 %v74
    %83 = vmatpush.msra.mxu0 %v72
    %84 = vmatpush.msra.mxu0 %v70
    %85 = vmatpush.msra.mxu0 %v68
    %86 = vmatpush.msra.mxu0 %v66
    %87 = vmatpush.msra.mxu0 %v64
    %88 = vmatpush.msra.mxu0 %v62
    %89 = vmatpush.msra.mxu0 %v60
    %90 = vmatpush.msra.mxu0 %v58
    %91 = vmatpush.msra.mxu0 %v56
    %92 = vmatpush.msra.mxu0 %v54
    %93 = vmatpush.msra.mxu0 %v52
    %94 = vmatpush.msra.mxu0 %v50
    %95 = vmatpush.msra.mxu0 %v48
    %96 = vmatmul.f32.gmra.mxu0 %v47
    %v97 = vpop.f32.mrf.mxu0
    %v98 = vadd.f32 0.0, %v97
    %99 = vdwg.mxu0
    %100 = vmatpush.msra.mxu0 %v79
    %101 = vmatpush.msra.mxu0 %v77
    %102 = vmatpush.msra.mxu0 %v75
    %103 = vmatpush.msra.mxu0 %v73
    %104 = vmatpush.msra.mxu0 %v71
    %105 = vmatpush.msra.mxu0 %v69
    %106 = vmatpush.msra.mxu0 %v67
    %107 = vmatpush.msra.mxu0 %v65
    %108 = vmatpush.msra.mxu0 %v63
    %109 = vmatpush.msra.mxu0 %v61
    %110 = vmatpush.msra.mxu0 %v59
    %111 = vmatpush.msra.mxu0 %v57
    %112 = vmatpush.msra.mxu0 %v55
    %113 = vmatpush.msra.mxu0 %v53
    %114 = vmatpush.msra.mxu0 %v51
    %115 = vmatpush.msra.mxu0 %v49
    %116 = vmatmul.f32.gmra.mxu0 %v47
    %v117 = vpop.f32.mrf.mxu0
    %v118 = vadd.f32 0.0, %v117
    %119 = vdwg.mxu0
    %v120 = vmax.f32 %v98, 0.0
    %v121 = vadd.f32 %v120, %v118
    %s122 = scalar_lea.vmem [#allocation2], 256
    %v123 = vld [vmem:[%s122] sm:$0xff]
    %v124 = vld [vmem:[%s122 + $0x8] sm:$0xff]
    %v125 = vld [vmem:[%s122 + $0x10] sm:$0xff]
    %v126 = vld [vmem:[%s122 + $0x18] sm:$0xff]
    %v127 = vld [vmem:[%s122 + $0x20] sm:$0xff]
    %v128 = vld [vmem:[%s122 + $0x28] sm:$0xff]
    %v129 = vld [vmem:[%s122 + $0x30] sm:$0xff]
    %v130 = vld [vmem:[%s122 + $0x38] sm:$0xff]
    %v131 = vld [vmem:[%s122 + $0x40] sm:$0xff]
    %v132 = vld [vmem:[%s122 + $0x48] sm:$0xff]
    %v133 = vld [vmem:[%s122 + $0x50] sm:$0xff]
    %v134 = vld [vmem:[%s122 + $0x58] sm:$0xff]
    %v135 = vld [vmem:[%s122 + $0x60] sm:$0xff]
    %v136 = vld [vmem:[%s122 + $0x68] sm:$0xff]
    %v137 = vld [vmem:[%s122 + $0x70] sm:$0xff]
    %v138 = vld [vmem:[%s122 + $0x78] sm:$0xff]
    %v139 = vld [vmem:[%s122 + $0x80] sm:$0xff]
    %v140 = vld [vmem:[%s122 + $0x88] sm:$0xff]
    %v141 = vld [vmem:[%s122 + $0x90] sm:$0xff]
    %v142 = vld [vmem:[%s122 + $0x98] sm:$0xff]
    %v143 = vld [vmem:[%s122 + $0xa0] sm:$0xff]
    %v144 = vld [vmem:[%s122 + $0xa8] sm:$0xff]
    %v145 = vld [vmem:[%s122 + $0xb0] sm:$0xff]
    %v146 = vld [vmem:[%s122 + $0xb8] sm:$0xff]
    %v147 = vld [vmem:[%s122 + $0xc0] sm:$0xff]
    %v148 = vld [vmem:[%s122 + $0xc8] sm:$0xff]
    %v149 = vld [vmem:[%s122 + $0xd0] sm:$0xff]
    %v150 = vld [vmem:[%s122 + $0xd8] sm:$0xff]
    %v151 = vld [vmem:[%s122 + $0xe0] sm:$0xff]
    %v152 = vld [vmem:[%s122 + $0xe8] sm:$0xff]
    %v153 = vld [vmem:[%s122 + $0xf0] sm:$0xff]
    %v154 = vld [vmem:[%s122 + $0xf8] sm:$0xff]
    %155 = vmatpush.msra.mxu0 %v153
    %156 = vmatpush.msra.mxu0 %v151
    %157 = vmatpush.msra.mxu0 %v149
    %158 = vmatpush.msra.mxu0 %v147
    %159 = vmatpush.msra.mxu0 %v145
    %160 = vmatpush.msra.mxu0 %v143
    %161 = vmatpush.msra.mxu0 %v141
    %162 = vmatpush.msra.mxu0 %v139
    %163 = vmatpush.msra.mxu0 %v137
    %164 = vmatpush.msra.mxu0 %v135
    %165 = vmatpush.msra.mxu0 %v133
    %166 = vmatpush.msra.mxu0 %v131
    %167 = vmatpush.msra.mxu0 %v129
    %168 = vmatpush.msra.mxu0 %v127
    %169 = vmatpush.msra.mxu0 %v125
    %170 = vmatpush.msra.mxu0 %v123
    %171 = vmatmul.f32.gmra.mxu0 %v121
    %v172 = vpop.f32.mrf.mxu0
    %v173 = vadd.f32 0.0, %v172
    %174 = vdwg.mxu0
    %175 = vmatpush.msra.mxu0 %v154
    %176 = vmatpush.msra.mxu0 %v152
    %177 = vmatpush.msra.mxu0 %v150
    %178 = vmatpush.msra.mxu0 %v148
    %179 = vmatpush.msra.mxu0 %v146
    %180 = vmatpush.msra.mxu0 %v144
    %181 = vmatpush.msra.mxu0 %v142
    %182 = vmatpush.msra.mxu0 %v140
    %183 = vmatpush.msra.mxu0 %v138
    %184 = vmatpush.msra.mxu0 %v136
    %185 = vmatpush.msra.mxu0 %v134
    %186 = vmatpush.msra.mxu0 %v132
    %187 = vmatpush.msra.mxu0 %v130
    %188 = vmatpush.msra.mxu0 %v128
    %189 = vmatpush.msra.mxu0 %v126
    %190 = vmatpush.msra.mxu0 %v124
    %191 = vmatmul.f32.gmra.mxu0 %v121
    %v192 = vpop.f32.mrf.mxu0
    %v193 = vadd.f32 0.0, %v192
    %194 = vdwg.mxu0
    %v195 = vmax.f32 %v173, 0.0
    %v196 = vadd.f32 %v195, %v193
    %s197 = scalar_lea.vmem [#allocation2], 512
    %v198 = vld [vmem:[%s197] sm:$0xff]
    %v199 = vld [vmem:[%s197 + $0x8] sm:$0xff]
    %v200 = vld [vmem:[%s197 + $0x10] sm:$0xff]
    %v201 = vld [vmem:[%s197 + $0x18] sm:$0xff]
    %v202 = vld [vmem:[%s197 + $0x20] sm:$0xff]
    %v203 = vld [vmem:[%s197 + $0x28] sm:$0xff]
    %v204 = vld [vmem:[%s197 + $0x30] sm:$0xff]
    %v205 = vld [vmem:[%s197 + $0x38] sm:$0xff]
    %v206 = vld [vmem:[%s197 + $0x40] sm:$0xff]
    %v207 = vld [vmem:[%s197 + $0x48] sm:$0xff]
    %v208 = vld [vmem:[%s197 + $0x50] sm:$0xff]
    %v209 = vld [vmem:[%s197 + $0x58] sm:$0xff]
    %v210 = vld [vmem:[%s197 + $0x60] sm:$0xff]
    %v211 = vld [vmem:[%s197 + $0x68] sm:$0xff]
    %v212 = vld [vmem:[%s197 + $0x70] sm:$0xff]
    %v213 = vld [vmem:[%s197 + $0x78] sm:$0xff]
    %v214 = vld [vmem:[%s197 + $0x80] sm:$0xff]
    %v215 = vld [vmem:[%s197 + $0x88] sm:$0xff]
    %v216 = vld [vmem:[%s197 + $0x90] sm:$0xff]
    %v217 = vld [vmem:[%s197 + $0x98] sm:$0xff]
    %v218 = vld [vmem:[%s197 + $0xa0] sm:$0xff]
    %v219 = vld [vmem:[%s197 + $0xa8] sm:$0xff]
    %v220 = vld [vmem:[%s197 + $0xb0] sm:$0xff]
    %v221 = vld [vmem:[%s197 + $0xb8] sm:$0xff]
    %v222 = vld [vmem:[%s197 + $0xc0] sm:$0xff]
    %v223 = vld [vmem:[%s197 + $0xc8] sm:$0xff]
    %v224 = vld [vmem:[%s197 + $0xd0] sm:$0xff]
    %v225 = vld [vmem:[%s197 + $0xd8] sm:$0xff]
    %v226 = vld [vmem:[%s197 + $0xe0] sm:$0xff]
    %v227 = vld [vmem:[%s197 + $0xe8] sm:$0xff]
    %v228 = vld [vmem:[%s197 + $0xf0] sm:$0xff]
    %v229 = vld [vmem:[%s197 + $0xf8] sm:$0xff]
    %230 = vmatpush.msra.mxu0 %v228
    %231 = vmatpush.msra.mxu0 %v226
    %232 = vmatpush.msra.mxu0 %v224
    %233 = vmatpush.msra.mxu0 %v222
    %234 = vmatpush.msra.mxu0 %v220
    %235 = vmatpush.msra.mxu0 %v218
    %236 = vmatpush.msra.mxu0 %v216
    %237 = vmatpush.msra.mxu0 %v214
    %238 = vmatpush.msra.mxu0 %v212
    %239 = vmatpush.msra.mxu0 %v210
    %240 = vmatpush.msra.mxu0 %v208
    %241 = vmatpush.msra.mxu0 %v206
    %242 = vmatpush.msra.mxu0 %v204
    %243 = vmatpush.msra.mxu0 %v202
    %244 = vmatpush.msra.mxu0 %v200
    %245 = vmatpush.msra.mxu0 %v198
    %246 = vmatmul.f32.gmra.mxu0 %v196
    %v247 = vpop.f32.mrf.mxu0
    %v248 = vadd.f32 0.0, %v247
    %249 = vdwg.mxu0
    %250 = vmatpush.msra.mxu0 %v229
    %251 = vmatpush.msra.mxu0 %v227
    %252 = vmatpush.msra.mxu0 %v225
    %253 = vmatpush.msra.mxu0 %v223
    %254 = vmatpush.msra.mxu0 %v221
    %255 = vmatpush.msra.mxu0 %v219
    %256 = vmatpush.msra.mxu0 %v217
    %257 = vmatpush.msra.mxu0 %v215
    %258 = vmatpush.msra.mxu0 %v213
    %259 = vmatpush.msra.mxu0 %v211
    %260 = vmatpush.msra.mxu0 %v209
    %261 = vmatpush.msra.mxu0 %v207
    %262 = vmatpush.msra.mxu0 %v205
    %263 = vmatpush.msra.mxu0 %v203
    %264 = vmatpush.msra.mxu0 %v201
    %265 = vmatpush.msra.mxu0 %v199
    %266 = vmatmul.f32.gmra.mxu0 %v196
    %v267 = vpop.f32.mrf.mxu0
    %v268 = vadd.f32 0.0, %v267
    %269 = vdwg.mxu0
    %v270 = vmax.f32 %v248, 0.0
    %v271 = vadd.f32 %v270, %v268
    %s272 = scalar_lea.vmem [#allocation2], 768
    %v273 = vld [vmem:[%s272] sm:$0xff]
    %v274 = vld [vmem:[%s272 + $0x8] sm:$0xff]
    %v275 = vld [vmem:[%s272 + $0x10] sm:$0xff]
    %v276 = vld [vmem:[%s272 + $0x18] sm:$0xff]
    %v277 = vld [vmem:[%s272 + $0x20] sm:$0xff]
    %v278 = vld [vmem:[%s272 + $0x28] sm:$0xff]
    %v279 = vld [vmem:[%s272 + $0x30] sm:$0xff]
    %v280 = vld [vmem:[%s272 + $0x38] sm:$0xff]
    %v281 = vld [vmem:[%s272 + $0x40] sm:$0xff]
    %v282 = vld [vmem:[%s272 + $0x48] sm:$0xff]
    %v283 = vld [vmem:[%s272 + $0x50] sm:$0xff]
    %v284 = vld [vmem:[%s272 + $0x58] sm:$0xff]
    %v285 = vld [vmem:[%s272 + $0x60] sm:$0xff]
    %v286 = vld [vmem:[%s272 + $0x68] sm:$0xff]
    %v287 = vld [vmem:[%s272 + $0x70] sm:$0xff]
    %v288 = vld [vmem:[%s272 + $0x78] sm:$0xff]
    %v289 = vld [vmem:[%s272 + $0x80] sm:$0xff]
    %v290 = vld [vmem:[%s272 + $0x88] sm:$0xff]
    %v291 = vld [vmem:[%s272 + $0x90] sm:$0xff]
    %v292 = vld [vmem:[%s272 + $0x98] sm:$0xff]
    %v293 = vld [vmem:[%s272 + $0xa0] sm:$0xff]
    %v294 = vld [vmem:[%s272 + $0xa8] sm:$0xff]
    %v295 = vld [vmem:[%s272 + $0xb0] sm:$0xff]
    %v296 = vld [vmem:[%s272 + $0xb8] sm:$0xff]
    %v297 = vld [vmem:[%s272 + $0xc0] sm:$0xff]
    %v298 = vld [vmem:[%s272 + $0xc8] sm:$0xff]
    %v299 = vld [vmem:[%s272 + $0xd0] sm:$0xff]
    %v300 = vld [vmem:[%s272 + $0xd8] sm:$0xff]
    %v301 = vld [vmem:[%s272 + $0xe0] sm:$0xff]
    %v302 = vld [vmem:[%s272 + $0xe8] sm:$0xff]
    %v303 = vld [vmem:[%s272 + $0xf0] sm:$0xff]
    %v304 = vld [vmem:[%s272 + $0xf8] sm:$0xff]
    %305 = vmatpush.msra.mxu0 %v303
    %306 = vmatpush.msra.mxu0 %v301
    %307 = vmatpush.msra.mxu0 %v299
    %308 = vmatpush.msra.mxu0 %v297
    %309 = vmatpush.msra.mxu0 %v295
    %310 = vmatpush.msra.mxu0 %v293
    %311 = vmatpush.msra.mxu0 %v291
    %312 = vmatpush.msra.mxu0 %v289
    %313 = vmatpush.msra.mxu0 %v287
    %314 = vmatpush.msra.mxu0 %v285
    %315 = vmatpush.msra.mxu0 %v283
    %316 = vmatpush.msra.mxu0 %v281
    %317 = vmatpush.msra.mxu0 %v279
    %318 = vmatpush.msra.mxu0 %v277
    %319 = vmatpush.msra.mxu0 %v275
    %320 = vmatpush.msra.mxu0 %v273
    %321 = vmatmul.f32.gmra.mxu0 %v271
    %v322 = vpop.f32.mrf.mxu0
    %v323 = vadd.f32 0.0, %v322
    %324 = vdwg.mxu0
    %325 = vmatpush.msra.mxu0 %v304
    %326 = vmatpush.msra.mxu0 %v302
    %327 = vmatpush.msra.mxu0 %v300
    %328 = vmatpush.msra.mxu0 %v298
    %329 = vmatpush.msra.mxu0 %v296
    %330 = vmatpush.msra.mxu0 %v294
    %331 = vmatpush.msra.mxu0 %v292
    %332 = vmatpush.msra.mxu0 %v290
    %333 = vmatpush.msra.mxu0 %v288
    %334 = vmatpush.msra.mxu0 %v286
    %335 = vmatpush.msra.mxu0 %v284
    %336 = vmatpush.msra.mxu0 %v282
    %337 = vmatpush.msra.mxu0 %v280
    %338 = vmatpush.msra.mxu0 %v278
    %339 = vmatpush.msra.mxu0 %v276
    %340 = vmatpush.msra.mxu0 %v274
    %341 = vmatmul.f32.gmra.mxu0 %v271
    %v342 = vpop.f32.mrf.mxu0
    %v343 = vadd.f32 0.0, %v342
    %344 = vdwg.mxu0
    %v345 = vmax.f32 %v323, 0.0
    %v346 = vadd.f32 %v345, %v343
    %v347 = vld [vmem:[#allocation5] sm:$0xff]
    %v348 = vld [vmem:[#allocation5 + $0x8] sm:$0xff]
    %v349 = vld [vmem:[#allocation5 + $0x10] sm:$0xff]
    %v350 = vld [vmem:[#allocation5 + $0x18] sm:$0xff]
    %v351 = vld [vmem:[#allocation5 + $0x20] sm:$0xff]
    %v352 = vld [vmem:[#allocation5 + $0x28] sm:$0xff]
    %v353 = vld [vmem:[#allocation5 + $0x30] sm:$0xff]
    %v354 = vld [vmem:[#allocation5 + $0x38] sm:$0xff]
    %v355 = vld [vmem:[#allocation5 + $0x40] sm:$0xff]
    %v356 = vld [vmem:[#allocation5 + $0x48] sm:$0xff]
    %v357 = vld [vmem:[#allocation5 + $0x50] sm:$0xff]
    %v358 = vld [vmem:[#allocation5 + $0x58] sm:$0xff]
    %v359 = vld [vmem:[#allocation5 + $0x60] sm:$0xff]
    %v360 = vld [vmem:[#allocation5 + $0x68] sm:$0xff]
    %v361 = vld [vmem:[#allocation5 + $0x70] sm:$0xff]
    %v362 = vld [vmem:[#allocation5 + $0x78] sm:$0xff]
    %363 = vmatpush.msra.mxu0 %v362
    %364 = vmatpush.msra.mxu0 %v361
    %365 = vmatpush.msra.mxu0 %v360
    %366 = vmatpush.msra.mxu0 %v359
    %367 = vmatpush.msra.mxu0 %v358
    %368 = vmatpush.msra.mxu0 %v357
    %369 = vmatpush.msra.mxu0 %v356
    %370 = vmatpush.msra.mxu0 %v355
    %371 = vmatpush.msra.mxu0 %v354
    %372 = vmatpush.msra.mxu0 %v353
    %373 = vmatpush.msra.mxu0 %v352
    %374 = vmatpush.msra.mxu0 %v351
    %375 = vmatpush.msra.mxu0 %v350
    %376 = vmatpush.msra.mxu0 %v349
    %377 = vmatpush.msra.mxu0 %v348
    %378 = vmatpush.msra.mxu0 %v347
    %379 = vmatmul.f32.gmra.mxu0 %v346
    %v380 = vpop.f32.mrf.mxu0
    %v381 = vadd.f32 0.0, %v380
    %382 = vdwg.mxu0
    %v383 = vmax.f32 %v381, 0.0
    %s384 = scalar_lea.vmem [#allocation5], 128
    %v385 = vld [vmem:[%s384] sm:$0xff]
    %v386 = vld [vmem:[%s384 + $0x8] sm:$0xff]
    %v387 = vld [vmem:[%s384 + $0x10] sm:$0xff]
    %v388 = vld [vmem:[%s384 + $0x18] sm:$0xff]
    %v389 = vld [vmem:[%s384 + $0x20] sm:$0xff]
    %v390 = vld [vmem:[%s384 + $0x28] sm:$0xff]
    %v391 = vld [vmem:[%s384 + $0x30] sm:$0xff]
    %v392 = vld [vmem:[%s384 + $0x38] sm:$0xff]
    %v393 = vld [vmem:[%s384 + $0x40] sm:$0xff]
    %v394 = vld [vmem:[%s384 + $0x48] sm:$0xff]
    %v395 = vld [vmem:[%s384 + $0x50] sm:$0xff]
    %v396 = vld [vmem:[%s384 + $0x58] sm:$0xff]
    %v397 = vld [vmem:[%s384 + $0x60] sm:$0xff]
    %v398 = vld [vmem:[%s384 + $0x68] sm:$0xff]
    %v399 = vld [vmem:[%s384 + $0x70] sm:$0xff]
    %v400 = vld [vmem:[%s384 + $0x78] sm:$0xff]
    %401 = vmatpush.msra.mxu0 %v400
    %402 = vmatpush.msra.mxu0 %v399
    %403 = vmatpush.msra.mxu0 %v398
    %404 = vmatpush.msra.mxu0 %v397
    %405 = vmatpush.msra.mxu0 %v396
    %406 = vmatpush.msra.mxu0 %v395
    %407 = vmatpush.msra.mxu0 %v394
    %408 = vmatpush.msra.mxu0 %v393
    %409 = vmatpush.msra.mxu0 %v392
    %410 = vmatpush.msra.mxu0 %v391
    %411 = vmatpush.msra.mxu0 %v390
    %412 = vmatpush.msra.mxu0 %v389
    %413 = vmatpush.msra.mxu0 %v388
    %414 = vmatpush.msra.mxu0 %v387
    %415 = vmatpush.msra.mxu0 %v386
    %416 = vmatpush.msra.mxu0 %v385
    %417 = vmatmul.f32.gmra.mxu0 %v383
    %v418 = vpop.f32.mrf.mxu0
    %v419 = vadd.f32 0.0, %v418
    %420 = vdwg.mxu0
    %v421 = vmax.f32 %v419, 0.0
    %s422 = scalar_lea.vmem [#allocation5], 256
    %v423 = vld [vmem:[%s422] sm:$0xff]
    %v424 = vld [vmem:[%s422 + $0x8] sm:$0xff]
    %v425 = vld [vmem:[%s422 + $0x10] sm:$0xff]
    %v426 = vld [vmem:[%s422 + $0x18] sm:$0xff]
    %v427 = vld [vmem:[%s422 + $0x20] sm:$0xff]
    %v428 = vld [vmem:[%s422 + $0x28] sm:$0xff]
    %v429 = vld [vmem:[%s422 + $0x30] sm:$0xff]
    %v430 = vld [vmem:[%s422 + $0x38] sm:$0xff]
    %v431 = vld [vmem:[%s422 + $0x40] sm:$0xff]
    %v432 = vld [vmem:[%s422 + $0x48] sm:$0xff]
    %v433 = vld [vmem:[%s422 + $0x50] sm:$0xff]
    %v434 = vld [vmem:[%s422 + $0x58] sm:$0xff]
    %v435 = vld [vmem:[%s422 + $0x60] sm:$0xff]
    %v436 = vld [vmem:[%s422 + $0x68] sm:$0xff]
    %v437 = vld [vmem:[%s422 + $0x70] sm:$0xff]
    %v438 = vld [vmem:[%s422 + $0x78] sm:$0xff]
    %439 = vmatpush.msra.mxu0 %v438
    %440 = vmatpush.msra.mxu0 %v437
    %441 = vmatpush.msra.mxu0 %v436
    %442 = vmatpush.msra.mxu0 %v435
    %443 = vmatpush.msra.mxu0 %v434
    %444 = vmatpush.msra.mxu0 %v433
    %445 = vmatpush.msra.mxu0 %v432
    %446 = vmatpush.msra.mxu0 %v431
    %447 = vmatpush.msra.mxu0 %v430
    %448 = vmatpush.msra.mxu0 %v429
    %449 = vmatpush.msra.mxu0 %v428
    %450 = vmatpush.msra.mxu0 %v427
    %451 = vmatpush.msra.mxu0 %v426
    %452 = vmatpush.msra.mxu0 %v425
    %453 = vmatpush.msra.mxu0 %v424
    %454 = vmatpush.msra.mxu0 %v423
    %455 = vmatmul.f32.gmra.mxu0 %v421
    %v456 = vpop.f32.mrf.mxu0
    %v457 = vadd.f32 0.0, %v456
    %458 = vdwg.mxu0
    %vm459 = vcmask 17408
    %460 = vst.msk [vmem:[#allocation7] sm:$0x3] %vm459, %v457
    // Predicated region
    $region22: #{forward.1} parent=1 // pred_check
      _
    $region23: #{forward.1} parent=1 // pred_check_branch
      %462 = sbr.rel (0) target = $region25
    $region24: #{forward.1} parent=1 // pred_region
      %464 = vsyncadd [#allocation4], 0
      %s466 = sshll.u32 [#allocation7], 4
      %s467 = int_to_ptr.vmem [resolvable:$true] %s466
      %s468 = sshll.u32 %s3, 4
      %s469 = int_to_ptr.hbm [resolvable:$true] %s468
      %471 = dma.vmem_to_hbm [thread:$0]  %s467, 32, %s469, [#allocation4]
    $region25: #{forward.1} parent=1 // pred_fallthru
      _
    // Predicated region
    $region26: #{forward.1} parent=1 // pred_check
      _
    $region27: #{forward.1} parent=1 // pred_check_branch
      %473 = sbr.rel (0) target = $region29
    $region28: #{forward.1} parent=1 // pred_region
      %475 = dma.done [#allocation4], 32
    $region29: #{forward.1} parent=1 // pred_fallthru
      _
    %476 = vsyncpa [#allocation3], 1
    %477 = vsyncpa [#allocation6], 1
    %478 = vsyncpa [#allocation4], 1

</llo_original>
